<compile_context>
chip_gen: v7x
topology: tpu7x:2x2x1
jax: 0.10.0
libtpu: 0.0.40
codegen_flags: <defaults>
</compile_context>

<pallas_src>
import functools

import jax
import jax.numpy as jnp
from jax.experimental import pallas as pl
from jax.experimental.pallas import tpu as pltpu


def _fitnet_kernel(s_ref, w_ref, t_ref, o_ref, acc_ref, *,
                   hw, tile_hw, n_total, n_per_split):
    # s_ref  : (C_in,  TILE_HW) student tile (native dtype)
    # w_ref  : (C_out, C_in)    1x1 conv weight (resident every step)
    # t_ref  : (C_out, TILE_HW) teacher tile (native dtype)
    # o_ref  : (8, 128)         per-parallel-slice partial SSE (scalar broadcast)
    # acc_ref: (C_out, TILE_HW) f32 running elementwise sum of squared errors
    p = pl.program_id(0)   # parallel (megacore) slice
    nn = pl.program_id(1)  # batch index within slice
    j = pl.program_id(2)   # H*W tile index

    @pl.when(jnp.logical_and(nn == 0, j == 0))
    def _():
        acc_ref[...] = jnp.zeros_like(acc_ref)

    # Mask (a) dummy batch rows of the ragged parallel split and
    # (b) lanes past H*W in the ragged last spatial tile.
    n_idx = p * n_per_split + nn
    lane = jax.lax.broadcasted_iota(jnp.int32, (1, tile_hw), 1)
    mask = jnp.logical_and(n_idx < n_total, j * tile_hw + lane < hw)

    pred = jnp.dot(w_ref[...], s_ref[...], preferred_element_type=jnp.float32)
    diff = pred - t_ref[...].astype(jnp.float32)
    diff = jnp.where(mask, diff, 0.0)
    acc_ref[...] += diff * diff

    @pl.when(jnp.logical_and(nn == pl.num_programs(1) - 1,
                             j == pl.num_programs(2) - 1))
    def _():
        o_ref[...] = jnp.full(o_ref.shape, jnp.sum(acc_ref[...]), o_ref.dtype)


def fitnet_loss(student, teacher, weight, *, tile_hw=1024, num_splits=2):
    """FitNet forward: mean((conv1x1(student, weight) - teacher)**2).

    student: (N, C_in, H, W) or (N, C_in)   [NCHW, like PyTorch]
    teacher: (N, C_out, H, W) or (N, C_out)
    weight : (C_out, C_in) or (C_out, C_in, 1, 1)  (nn.Conv2d 1x1, bias=False)
    """
    if student.ndim == 2:
        # unsqueeze(2).unsqueeze(3) -> H = W = 1
        student = student[:, :, None, None]
        teacher = teacher[:, :, None, None]
    if weight.ndim == 4:
        weight = weight.reshape(weight.shape[0], weight.shape[1])

    n, c_in, h, w = student.shape
    _, c_out, _, _ = teacher.shape
    hw = h * w

    # Free reshapes (no transpose, no dtype cast): channels contiguous,
    # H*W on the lane axis.
    s3 = student.reshape(n, c_in, hw)
    t3 = teacher.reshape(n, c_out, hw)

    tile_hw = max(128, (tile_hw // 128) * 128)
    tile_blk = hw if hw <= tile_hw else tile_hw  # full dim, or 128-multiple
    num_hw_tiles = pl.cdiv(hw, tile_blk)

    num_splits = max(1, num_splits)
    n_per_split = pl.cdiv(n, num_splits)

    def in_map(p, nn, j):
        # Clamp dummy batch rows of the ragged parallel split to a valid
        # block; their contribution is zeroed by the in-kernel mask.
        n_idx = jnp.minimum(p * n_per_split + nn, n - 1)
        return (n_idx, 0, j)

    kernel = functools.partial(
        _fitnet_kernel, hw=hw, tile_hw=tile_blk, n_total=n,
        n_per_split=n_per_split)

    partials = pl.pallas_call(
        kernel,
        out_shape=jax.ShapeDtypeStruct((num_splits, 8, 128), jnp.float32),
        grid_spec=pltpu.PrefetchScalarGridSpec(
            num_scalar_prefetch=0,
            grid=(num_splits, n_per_split, num_hw_tiles),
            in_specs=[
                pl.BlockSpec((None, c_in, tile_blk), in_map),
                pl.BlockSpec((c_out, c_in), lambda p, nn, j: (0, 0)),
                pl.BlockSpec((None, c_out, tile_blk), in_map),
            ],
            out_specs=pl.BlockSpec((None, 8, 128), lambda p, nn, j: (p, 0, 0)),
            scratch_shapes=[pltpu.VMEM((c_out, tile_blk), jnp.float32)],
        ),
        compiler_params=pltpu.CompilerParams(
            dimension_semantics=("parallel", "arbitrary", "arbitrary"),
            vmem_limit_bytes=48 * 1024 * 1024,
        ),
    )(s3, weight, t3)

    sse = jnp.sum(partials[:, 0, 0])
    total_elems = n * c_out * h * w  # mean over the conv-output / teacher shape
    return sse / jnp.float32(total_elems)


def _reference(student, teacher, weight):
    # Pure-JAX reference of the PyTorch forward (for sanity check).
    if student.ndim == 2:
        student = student[:, :, None, None]
        teacher = teacher[:, :, None, None]
    if weight.ndim == 4:
        weight = weight.reshape(weight.shape[0], weight.shape[1])
    out = jnp.einsum("nchw,oc->nohw", student, weight,
                     precision=jax.lax.Precision.HIGHEST)
    return jnp.mean((out - teacher) ** 2)


if __name__ == "__main__":
    key = jax.random.PRNGKey(0)
    k1, k2, k3 = jax.random.split(key, 3)

    N, C_IN, C_OUT, H, W = 2, 4, 8, 16, 16

    student = jax.random.normal(k1, (N, C_IN, H, W), dtype=jnp.float32)
    teacher = jax.random.normal(k2, (N, C_OUT, H, W), dtype=jnp.float32)
    # nn.Conv2d(C_in, C_out, 1, bias=False).weight ~ U(-0.005, 0.005), (C_out, C_in)
    weight = jax.random.uniform(
        k3, (C_OUT, C_IN), dtype=jnp.float32, minval=-0.005, maxval=0.005)

    loss = jax.jit(fitnet_loss)(student, teacher, weight)
    jax.block_until_ready(loss)

    ref = _reference(student, teacher, weight)
    assert jnp.allclose(loss, ref, rtol=1e-4, atol=1e-6), (loss, ref)

    print("KERNEL_OK")
</pallas_src>

<mosaic_0001>
module attributes {stable_mosaic.version = 11 : i64} {
  func.func @_fitnet_kernel(%arg0: i32, %arg1: i32, %arg2: i32, %arg3: memref<1x4x256xf32, #tpu.memory_space<vmem>>, %arg4: memref<8x4xf32, #tpu.memory_space<vmem>>, %arg5: memref<1x8x256xf32, #tpu.memory_space<vmem>>, %arg6: memref<1x8x128xf32, #tpu.memory_space<vmem>>, %arg7: memref<8x256xf32, #tpu.memory_space<vmem>>) attributes {dimension_semantics = [#tpu.dimension_semantics<parallel>, #tpu.dimension_semantics<arbitrary>, #tpu.dimension_semantics<arbitrary>], iteration_bounds = array<i64: 2, 1, 1>, scalar_prefetch = 0 : i64, scratch_operands = 1 : i64, tpu.core_type = #tpu.core_type<tc>, window_params = [{transform_indices = @transform_0, window_bounds = array<i64: 1, 4, 256>}, {pipeline_mode = #tpu.pipeline_mode<synchronous>, transform_indices = @transform_1, window_bounds = array<i64: 8, 4>}, {transform_indices = @transform_2, window_bounds = array<i64: 1, 8, 256>}, {transform_indices = @transform_3, window_bounds = array<i64: 1, 8, 128>}]} {
    %c0_i32 = arith.constant 0 : i32
    %0 = arith.cmpi eq, %arg1, %c0_i32 : i32
    %c0_i32_0 = arith.constant 0 : i32
    %1 = arith.cmpi eq, %arg2, %c0_i32_0 : i32
    %2 = arith.andi %0, %1 : i1
    %3 = arith.extui %2 : i1 to i32
    %c0_i32_1 = arith.constant 0 : i32
    %4 = arith.cmpi ne, %3, %c0_i32_1 : i32
    scf.if %4 {
      %cst_18 = arith.constant 0.000000e+00 : f32
      %36 = vector.broadcast %cst_18 : f32 to vector<8x256xf32>
      %c0_19 = arith.constant 0 : index
      %c0_20 = arith.constant 0 : index
      %37 = vector.load %arg7[%c0_19, %c0_20] : memref<8x256xf32, #tpu.memory_space<vmem>>, vector<8x256xf32>
      tpu.vector_store %arg7[%c0_19, %c0_20], %36 {strides = array<i32>} : memref<8x256xf32, #tpu.memory_space<vmem>>, vector<8x256xf32>,
    } else {
    }
    %c1_i32 = arith.constant 1 : i32
    %5 = arith.muli %arg0, %c1_i32 : i32
    %6 = arith.addi %5, %arg1 : i32
    %7 = tpu.iota {dimensions = array<i32: 1>} : vector<1x256xi32>
    %c2_i32 = arith.constant 2 : i32
    %8 = arith.cmpi slt, %6, %c2_i32 : i32
    %c256_i32 = arith.constant 256 : i32
    %9 = arith.muli %arg2, %c256_i32 : i32
    %10 = vector.broadcast %9 : i32 to vector<1x256xi32>
    %11 = arith.addi %10, %7 : vector<1x256xi32>
    %c256_i32_2 = arith.constant 256 : i32
    %12 = vector.broadcast %c256_i32_2 : i32 to vector<1x256xi32>
    %13 = arith.cmpi slt, %11, %12 : vector<1x256xi32>
    %14 = vector.broadcast %8 : i1 to vector<1x256xi1>
    %15 = arith.andi %14, %13 : vector<1x256xi1>
    %c0 = arith.constant 0 : index
    %c0_3 = arith.constant 0 : index
    %16 = vector.load %arg4[%c0, %c0_3] : memref<8x4xf32, #tpu.memory_space<vmem>>, vector<8x4xf32>
    %c0_4 = arith.constant 0 : index
    %c0_5 = arith.constant 0 : index
    %c0_6 = arith.constant 0 : index
    %17 = vector.load %arg3[%c0_4, %c0_5, %c0_6] : memref<1x4x256xf32, #tpu.memory_space<vmem>>, vector<1x4x256xf32>
    %18 = vector.shape_cast %17 : vector<1x4x256xf32> to vector<4x256xf32>
    %cst = arith.constant dense<0.000000e+00> : vector<8x256xf32>
    %19 = tpu.matmul %16, %18, %cst {dimension_numbers = #tpu.dot_dimension_numbers<[1], [0], [0], [1], [0, 0, 1, 1], [], []>} : vector<8x4xf32>, vector<4x256xf32>, vector<8x256xf32> -> vector<8x256xf32>
    %c0_7 = arith.constant 0 : index
    %c0_8 = arith.constant 0 : index
    %c0_9 = arith.constant 0 : index
    %20 = vector.load %arg5[%c0_7, %c0_8, %c0_9] : memref<1x8x256xf32, #tpu.memory_space<vmem>>, vector<1x8x256xf32>
    %21 = vector.shape_cast %20 : vector<1x8x256xf32> to vector<8x256xf32>
    %22 = arith.subf %19, %21 : vector<8x256xf32>
    %cst_10 = arith.constant 0.000000e+00 : f32
    %23 = vector.shape_cast %15 : vector<1x256xi1> to vector<1x256xi1>
    %24 = vector.broadcast %23 : vector<1x256xi1> to vector<8x256xi1>
    %25 = vector.broadcast %cst_10 : f32 to vector<8x256xf32>
    %26 = arith.select %24, %22, %25 : vector<8x256xi1>, vector<8x256xf32>
    %c0_11 = arith.constant 0 : index
    %c0_12 = arith.constant 0 : index
    %27 = vector.load %arg7[%c0_11, %c0_12] : memref<8x256xf32, #tpu.memory_space<vmem>>, vector<8x256xf32>
    %28 = arith.mulf %26, %26 : vector<8x256xf32>
    %29 = arith.addf %27, %28 : vector<8x256xf32>
    %c0_13 = arith.constant 0 : index
    %c0_14 = arith.constant 0 : index
    %30 = vector.load %arg7[%c0_13, %c0_14] : memref<8x256xf32, #tpu.memory_space<vmem>>, vector<8x256xf32>
    tpu.vector_store %arg7[%c0_13, %c0_14], %29 {strides = array<i32>} : memref<8x256xf32, #tpu.memory_space<vmem>>, vector<8x256xf32>,
    %c0_i32_15 = arith.constant 0 : i32
    %31 = arith.cmpi eq, %arg1, %c0_i32_15 : i32
    %c0_i32_16 = arith.constant 0 : i32
    %32 = arith.cmpi eq, %arg2, %c0_i32_16 : i32
    %33 = arith.andi %31, %32 : i1
    %34 = arith.extui %33 : i1 to i32
    %c0_i32_17 = arith.constant 0 : i32
    %35 = arith.cmpi ne, %34, %c0_i32_17 : i32
    scf.if %35 {
      %c0_18 = arith.constant 0 : index
      %c0_19 = arith.constant 0 : index
      %36 = vector.load %arg7[%c0_18, %c0_19] : memref<8x256xf32, #tpu.memory_space<vmem>>, vector<8x256xf32>
      %37 = vector.shape_cast %36 : vector<8x256xf32> to vector<1x8x256xf32>
      %cst_20 = arith.constant dense<0.000000e+00> : vector<1xf32>
      %38 = vector.multi_reduction <add>, %37, %cst_20 [1, 2] : vector<1x8x256xf32> to vector<1xf32>
      %39 = vector.shape_cast %38 : vector<1xf32> to vector<1x1x1xf32>
      %40 = vector.extract %39[0, 0, 0] : f32 from vector<1x1x1xf32>
      %41 = vector.broadcast %40 : f32 to vector<8x128xf32>
      %c0_21 = arith.constant 0 : index
      %c0_22 = arith.constant 0 : index
      %c0_23 = arith.constant 0 : index
      %42 = vector.load %arg6[%c0_21, %c0_22, %c0_23] : memref<1x8x128xf32, #tpu.memory_space<vmem>>, vector<1x8x128xf32>
      %43 = vector.shape_cast %42 : vector<1x8x128xf32> to vector<8x128xf32>
      %44 = vector.shape_cast %41 : vector<8x128xf32> to vector<1x8x128xf32>
      tpu.vector_store %arg6[%c0_21, %c0_22, %c0_23], %44 {strides = array<i32>} : memref<1x8x128xf32, #tpu.memory_space<vmem>>, vector<1x8x128xf32>,
    } else {
    }
    return
  }
  func.func @transform_0(%arg0: i32, %arg1: i32, %arg2: i32) -> (i32, i32, i32) {
    %c1_i32 = arith.constant 1 : i32
    %0 = arith.muli %arg0, %c1_i32 : i32
    %1 = arith.addi %0, %arg1 : i32
    %c1_i32_0 = arith.constant 1 : i32
    %2 = arith.minsi %1, %c1_i32_0 : i32
    %c0_i32 = arith.constant 0 : i32
    %c0_i32_1 = arith.constant 0 : i32
    return %2, %c0_i32, %arg2 : i32, i32, i32
  }
  func.func @transform_1(%arg0: i32, %arg1: i32, %arg2: i32) -> (i32, i32) {
    %c0_i32 = arith.constant 0 : i32
    %c0_i32_0 = arith.constant 0 : i32
    %c0_i32_1 = arith.constant 0 : i32
    return %c0_i32, %c0_i32_0 : i32, i32
  }
  func.func @transform_2(%arg0: i32, %arg1: i32, %arg2: i32) -> (i32, i32, i32) {
    %c1_i32 = arith.constant 1 : i32
    %0 = arith.muli %arg0, %c1_i32 : i32
    %1 = arith.addi %0, %arg1 : i32
    %c1_i32_0 = arith.constant 1 : i32
    %2 = arith.minsi %1, %c1_i32_0 : i32
    %c0_i32 = arith.constant 0 : i32
    %c0_i32_1 = arith.constant 0 : i32
    return %2, %c0_i32, %arg2 : i32, i32, i32
  }
  func.func @transform_3(%arg0: i32, %arg1: i32, %arg2: i32) -> (i32, i32, i32) {
    %c0_i32 = arith.constant 0 : i32
    %c0_i32_0 = arith.constant 0 : i32
    %c0_i32_1 = arith.constant 0 : i32
    return %arg0, %c0_i32, %c0_i32_0 : i32, i32, i32
  }
}

</mosaic_0001>

<llo_original>
// kernel: fitnet_loss.1
$region0: #{fitnet_loss.1}
  #allocation0 [shape = 'u32[]', space=smem, size = 0x4, offset = 0x4, fixed_abs, tag = 'smem constant byte address 0x4 - core index']
  #allocation1 [shape = 'u32[144,128]{1,0:T(1,128)}', space=vmem, size = 0x12000, scoped, tag = 'internal scratch']
  #allocation2 [shape = 'f32[8,256]{1,0:T(8,128)}', space=vmem, size = 0x2000, scoped, tag = 'scratch operand']
  %s0 = inlined_call_operand.vmem [shape: f32[2,4,256], index: 0, kind: input, shape index: {}]
  %s1 = inlined_call_operand.vmem [shape: f32[8,4], index: 1, kind: input, shape index: {}]
  %s2 = inlined_call_operand.vmem [shape: f32[2,8,256], index: 2, kind: input, shape index: {}]
  %s3 = inlined_call_operand.vmem [shape: f32[2,8,128], index: 3, kind: output, shape index: {}]
  %s4 = sld [smem:[#allocation0]]
  $region53: #{fitnet_loss.1} parent=0
    _
  %s6 = ssub.s32 1, %s4
  %s7 = scalar_select 0, %s6, %s4
  loop: start=0, step=1, limit=4
  $region2: #{fitnet_loss.1} parent=0 // loop_pre_header
    _
  $region3: #{fitnet_loss.1} parent=0 // loop_header
    %s9 = sphi 0, %s13
    %p10 = scmp.ge.s32.totalorder %s9, 4
    %s16 = sphi 0, %s35
    %s17 = sphi 0, %s31
    %s18 = sphi 0, %s27
    %s19 = sphi 0, %s16
    %s20 = sphi 0, %s17
    %s21 = sphi 0, %s18
    %s22 = sphi 0, %s19
    %s23 = sphi 0, %s20
    %s24 = sphi 0, %s21
    %s46 = sphi 0, %s48
    %s49 = sphi 0, %s46
    %s50 = sphi 0, %s49
    %s66 = sphi 0, %s50
    %s70 = sphi 0, %s70
    %s72 = sphi 0, %s70
    %s73 = sphi 0, %s72
    %s87 = sphi 0, %s73
    %s101 = sphi 0, %s103
    %s104 = sphi 0, %s101
    %s105 = sphi 0, %s104
    %s121 = sphi 0, %s105
    %s127 = sphi 0, %s129
    %s130 = sphi 0, %s127
    %s131 = sphi 0, %s130
    %s147 = sphi 0, %s131
  $region4: #{fitnet_loss.1} parent=0 // loop_header_branch
    %12 = sbr.rel (%p10) target = $region8
  $region5: #{fitnet_loss.1} parent=0 // loop_body
    %s14 = ssub.s32 %s9, 1
    %s15 = ssub.s32 %s9, 2
    %s25 = sadd.s32 1, %s18
    %p26 = scmp.ge.s32.totalorder %s25, 1
    %s27 = scalar_select %p26, 0, %s25
    %s28 = sadd.s32 1, %s17
    %s29 = scalar_select %p26, %s28, %s17
    %p30 = scmp.ge.s32.totalorder %s29, 1
    %s31 = scalar_select %p30, 0, %s29
    %s32 = sadd.s32 1, %s16
    %s33 = scalar_select %p30, %s32, %s16
    %p34 = scmp.ge.s32.totalorder %s33, 2
    %s35 = scalar_select %p34, 0, %s33
    %s36 = sadd.s32 %s16, %s17
    %p37 = scmp.lt.s32.totalorder %s36, 1
    %s38 = scalar_select %p37, %s36, 1
    %s39 = sadd.s32 %s35, %s31
    %p40 = scmp.lt.s32.totalorder %s39, 1
    %s41 = scalar_select %p40, %s39, 1
    %s42 = ssub.s32 %s38, %s41
    %s43 = ssub.s32 %s18, %s27
    %s44 = sor.u32 %s42, %s43
    %p45 = scmp.eq.s32.totalorder %s44, 0
    %s47 = sadd.s32 %s46, 1
    %s48 = scalar_select %p45, %s46, %s47
    %p51 = pneg %p45
    %p52 = scmp.eq.s32.totalorder %s9, 1
    %p53 = por %p51, %p52
    %p54 = scmp.ne.s32.totalorder %s46, %s49
    %p55 = scmp.eq.s32.totalorder %s9, 0
    %p56 = por %p54, %p55
    %p57 = scmp.ne.s32.totalorder %s46, %s49
    %p58 = scmp.eq.s32.totalorder %s14, 1
    %p59 = por %p57, %p58
    %p60 = scmp.ne.s32.totalorder %s49, %s50
    %p61 = scmp.eq.s32.totalorder %s14, 0
    %p62 = por %p60, %p61
    %p63 = scmp.ne.s32.totalorder %s49, %s50
    %p64 = scmp.eq.s32.totalorder %s15, 1
    %p65 = por %p63, %p64
    %p67 = scmp.ne.s32.totalorder %s50, %s66
    %p68 = scmp.eq.s32.totalorder %s15, 0
    %p69 = por %p67, %p68
    %s71 = sadd.s32 %s70, 1
    %p74 = scmp.eq.s32.totalorder %s9, 1
    %p75 = scmp.ne.s32.totalorder %s70, %s72
    %p76 = scmp.eq.s32.totalorder %s9, 0
    %p77 = por %p75, %p76
    %p78 = scmp.ne.s32.totalorder %s70, %s72
    %p79 = scmp.eq.s32.totalorder %s14, 1
    %p80 = por %p78, %p79
    %p81 = scmp.ne.s32.totalorder %s72, %s73
    %p82 = scmp.eq.s32.totalorder %s14, 0
    %p83 = por %p81, %p82
    %p84 = scmp.ne.s32.totalorder %s72, %s73
    %p85 = scmp.eq.s32.totalorder %s15, 1
    %p86 = por %p84, %p85
    %p88 = scmp.ne.s32.totalorder %s73, %s87
    %p89 = scmp.eq.s32.totalorder %s15, 0
    %p90 = por %p88, %p89
    %s91 = sadd.s32 %s16, %s17
    %p92 = scmp.lt.s32.totalorder %s91, 1
    %s93 = scalar_select %p92, %s91, 1
    %s94 = sadd.s32 %s35, %s31
    %p95 = scmp.lt.s32.totalorder %s94, 1
    %s96 = scalar_select %p95, %s94, 1
    %s97 = ssub.s32 %s93, %s96
    %s98 = ssub.s32 %s18, %s27
    %s99 = sor.u32 %s97, %s98
    %p100 = scmp.eq.s32.totalorder %s99, 0
    %s102 = sadd.s32 %s101, 1
    %s103 = scalar_select %p100, %s101, %s102
    %p106 = pneg %p100
    %p107 = scmp.eq.s32.totalorder %s9, 1
    %p108 = por %p106, %p107
    %p109 = scmp.ne.s32.totalorder %s101, %s104
    %p110 = scmp.eq.s32.totalorder %s9, 0
    %p111 = por %p109, %p110
    %p112 = scmp.ne.s32.totalorder %s101, %s104
    %p113 = scmp.eq.s32.totalorder %s14, 1
    %p114 = por %p112, %p113
    %p115 = scmp.ne.s32.totalorder %s104, %s105
    %p116 = scmp.eq.s32.totalorder %s14, 0
    %p117 = por %p115, %p116
    %p118 = scmp.ne.s32.totalorder %s104, %s105
    %p119 = scmp.eq.s32.totalorder %s15, 1
    %p120 = por %p118, %p119
    %p122 = scmp.ne.s32.totalorder %s105, %s121
    %p123 = scmp.eq.s32.totalorder %s15, 0
    %p124 = por %p122, %p123
    %s125 = ssub.s32 %s16, %s35
    %p126 = scmp.eq.s32.totalorder %s125, 0
    %s128 = sadd.s32 %s127, 1
    %s129 = scalar_select %p126, %s127, %s128
    %p132 = pneg %p126
    %p133 = scmp.eq.s32.totalorder %s9, 1
    %p134 = por %p132, %p133
    %p135 = scmp.ne.s32.totalorder %s127, %s130
    %p136 = scmp.eq.s32.totalorder %s9, 0
    %p137 = por %p135, %p136
    %p138 = scmp.ne.s32.totalorder %s127, %s130
    %p139 = scmp.eq.s32.totalorder %s14, 1
    %p140 = por %p138, %p139
    %p141 = scmp.ne.s32.totalorder %s130, %s131
    %p142 = scmp.eq.s32.totalorder %s14, 0
    %p143 = por %p141, %p142
    %p144 = scmp.ne.s32.totalorder %s130, %s131
    %p145 = scmp.eq.s32.totalorder %s15, 1
    %p146 = por %p144, %p145
    %p148 = scmp.ne.s32.totalorder %s131, %s147
    %p149 = scmp.eq.s32.totalorder %s15, 0
    %p150 = por %p148, %p149
    %p151 = scmp.le.s32.totalorder 1, %s9
    %p152 = scmp.lt.s32.totalorder %s9, 3
    %p153 = pnand %p151, %p152
    %p154 = pneg %p153
    // Predicated region
    $region9: #{fitnet_loss.1} parent=5 // pred_check
      _
    $region10: #{fitnet_loss.1} parent=5 // pred_check_branch
      %156 = sbr.rel (%p153) target = $region12
    $region11: #{fitnet_loss.1} parent=5 // pred_region
      %s157 = ssub.s32 %s9, 1
      // Predicated region
      $region13: #{fitnet_loss.1} parent=11 // pred_check
        %p158 = pneg %p83
      $region14: #{fitnet_loss.1} parent=11 // pred_check_branch
        %160 = sbr.rel (%p158) target = $region16
      $region15: #{fitnet_loss.1} parent=11 // pred_region
        _
      $region16: #{fitnet_loss.1} parent=11 // pred_fallthru
        _
    $region12: #{fitnet_loss.1} parent=5 // pred_fallthru
      _
    %p161 = scmp.lt.s32.totalorder %s9, 2
    // Predicated region
    $region17: #{fitnet_loss.1} parent=5 // pred_check
      %p162 = pneg %p161
    $region18: #{fitnet_loss.1} parent=5 // pred_check_branch
      %164 = sbr.rel (%p162) target = $region20
    $region19: #{fitnet_loss.1} parent=5 // pred_region
      // Predicated region
      $region21: #{fitnet_loss.1} parent=19 // pred_check
        %p165 = pneg %p56
      $region22: #{fitnet_loss.1} parent=19 // pred_check_branch
        %167 = sbr.rel (%p165) target = $region24
      $region23: #{fitnet_loss.1} parent=19 // pred_region
        %s168 = sadd.s32 %s16, %s17
        %p169 = scmp.lt.s32.totalorder %s168, 1
        %s170 = scalar_select %p169, %s168, 1
        %s171 = smul.u32 2, %s18
        %p172 = scmp.lt.s32.totalorder %s170, 1
        %s173 = scalar_select %p172, %s170, 1
        %p174 = scmp.lt.s32.totalorder %s171, 1
        %s175 = scalar_select %p174, %s171, 1
        %s176 = smul.addr %s173, 2
        %s177 = sadd.s32 %s175, %s176
        %s178 = smul.addr %s177, 4
        %s179 = scalar_lea.vmem %s0, %s178
        %s180 = sadd.s32 %s16, %s17
        %p181 = scmp.lt.s32.totalorder %s180, 1
        %s182 = scalar_select %p181, %s180, 1
        %s183 = smul.u32 2, %s18
      $region24: #{fitnet_loss.1} parent=19 // pred_fallthru
        _
      // Predicated region
      $region25: #{fitnet_loss.1} parent=19 // pred_check
        %p184 = pneg %p111
      $region26: #{fitnet_loss.1} parent=19 // pred_check_branch
        %186 = sbr.rel (%p184) target = $region28
      $region27: #{fitnet_loss.1} parent=19 // pred_region
        %s187 = sadd.s32 %s16, %s17
        %p188 = scmp.lt.s32.totalorder %s187, 1
        %s189 = scalar_select %p188, %s187, 1
        %s190 = smul.u32 2, %s18
        %p191 = scmp.lt.s32.totalorder %s189, 1
        %s192 = scalar_select %p191, %s189, 1
        %p193 = scmp.lt.s32.totalorder %s190, 1
        %s194 = scalar_select %p193, %s190, 1
        %s195 = smul.addr %s192, 2
        %s196 = sadd.s32 %s194, %s195
        %s197 = smul.addr %s196, 8
        %s198 = scalar_lea.vmem %s2, %s197
        %s199 = sadd.s32 %s16, %s17
        %p200 = scmp.lt.s32.totalorder %s199, 1
        %s201 = scalar_select %p200, %s199, 1
        %s202 = smul.u32 2, %s18
      $region28: #{fitnet_loss.1} parent=19 // pred_fallthru
        _
    $region20: #{fitnet_loss.1} parent=5 // pred_fallthru
      _
    %p203 = scmp.le.s32.totalorder 1, %s9
    %p204 = scmp.lt.s32.totalorder %s9, 3
    %p205 = pnand %p203, %p204
    %p206 = pneg %p205
    // Predicated region
    $region29: #{fitnet_loss.1} parent=5 // pred_check
      _
    $region30: #{fitnet_loss.1} parent=5 // pred_check_branch
      %208 = sbr.rel (%p205) target = $region32
    $region31: #{fitnet_loss.1} parent=5 // pred_region
      %s209 = ssub.s32 %s9, 1
      %s210 = sadd.s32 %s19, %s20
      %p211 = scmp.lt.s32.totalorder %s210, 1
      %s212 = scalar_select %p211, %s210, 1
      %s213 = smul.u32 2, %s21
      %p214 = scmp.lt.s32.totalorder %s212, 1
      %s215 = scalar_select %p214, %s212, 1
      %p216 = scmp.lt.s32.totalorder %s213, 1
      %s217 = scalar_select %p216, %s213, 1
      %s218 = smul.addr %s215, 2
      %s219 = sadd.s32 %s217, %s218
      %s220 = smul.addr %s219, 4
      %s221 = scalar_lea.vmem %s0, %s220
      %p222 = pneg %p62
      %p223 = pneg %p59
      %p224 = pneg %p83
      %p225 = pneg %p80
      %s226 = sadd.s32 %s19, %s20
      %p227 = scmp.lt.s32.totalorder %s226, 1
      %s228 = scalar_select %p227, %s226, 1
      %s229 = smul.u32 2, %s21
      %p230 = scmp.lt.s32.totalorder %s228, 1
      %s231 = scalar_select %p230, %s228, 1
      %p232 = scmp.lt.s32.totalorder %s229, 1
      %s233 = scalar_select %p232, %s229, 1
      %s234 = smul.addr %s231, 2
      %s235 = sadd.s32 %s233, %s234
      %s236 = smul.addr %s235, 8
      %s237 = scalar_lea.vmem %s2, %s236
      %p238 = pneg %p117
      %p239 = pneg %p114
      %p240 = pneg %p143
      %p241 = pneg %p140
      %p242 = scmp.lt.s32.totalorder %s19, 1
      %s243 = scalar_select %p242, %s19, 1
      %s244 = smul.addr %s243, 8
      %s245 = scalar_lea.vmem %s3, %s244
      %s246 = sadd.s32 %s19, %s20
      %p247 = scmp.lt.s32.totalorder %s246, 1
      %s248 = scalar_select %p247, %s246, 1
      %s249 = smul.u32 2, %s21
      %p250 = scmp.lt.s32.totalorder %s248, 1
      %s251 = scalar_select %p250, %s248, 1
      %p252 = scmp.lt.s32.totalorder %s249, 1
      %s253 = scalar_select %p252, %s249, 1
      %s254 = smul.addr %s251, 2
      %s255 = sadd.s32 %s253, %s254
      %s256 = smul.addr %s255, 4
      %s257 = scalar_lea.vmem %s0, %s256
      %s258 = sadd.s32 %s19, %s20
      %p259 = scmp.lt.s32.totalorder %s258, 1
      %s260 = scalar_select %p259, %s258, 1
      %s261 = smul.u32 2, %s21
      %s262 = sadd.s32 %s19, %s20
      %p263 = scmp.lt.s32.totalorder %s262, 1
      %s264 = scalar_select %p263, %s262, 1
      %s265 = smul.u32 2, %s21
      %p266 = scmp.lt.s32.totalorder %s264, 1
      %s267 = scalar_select %p266, %s264, 1
      %p268 = scmp.lt.s32.totalorder %s265, 1
      %s269 = scalar_select %p268, %s265, 1
      %s270 = smul.addr %s267, 2
      %s271 = sadd.s32 %s269, %s270
      %s272 = smul.addr %s271, 8
      %s273 = scalar_lea.vmem %s2, %s272
      %s274 = sadd.s32 %s19, %s20
      %p275 = scmp.lt.s32.totalorder %s274, 1
      %s276 = scalar_select %p275, %s274, 1
      %s277 = smul.u32 2, %s21
      %p278 = scmp.lt.s32.totalorder %s19, 1
      %s279 = scalar_select %p278, %s19, 1
      %s280 = smul.addr %s279, 8
      %s281 = scalar_lea.vmem %s3, %s280
      %p282 = scmp.eq.s32.totalorder %s20, 0
      %p283 = scmp.eq.s32.totalorder %s21, 0
      %p284 = pnand %p282, %p283
      %p285 = pneg %p284
      // Predicated region
      $region33: #{fitnet_loss.1} parent=31 // pred_check
        _
      $region34: #{fitnet_loss.1} parent=31 // pred_check_branch
        %287 = sbr.rel (%p284) target = $region36
      $region35: #{fitnet_loss.1} parent=31 // pred_region
        %288 = vst [vmem:[#allocation2] sm:$0xff] 0.0
        %289 = vst [vmem:[#allocation2 + $0x8] sm:$0xff] 0.0
      $region36: #{fitnet_loss.1} parent=31 // pred_fallthru
        _
      %s290 = sadd.s32 %s19, %s20
      %v291 = vlaneseq
      %v292 = vand.u32 %v291, 127
      %v293 = vadd.s32 %v292, 128
      %p294 = scmp.lt.s32.totalorder %s290, 2
      %s295 = smul.u32 %s21, 256
      %v296 = vstv %s295
      %v297 = vadd.s32 %v296, %v292
      %v298 = vadd.s32 %v296, %v293
      %vm299 = vcmp.lt.s32.totalorder %v297, 256
      %vm300 = vcmp.lt.s32.totalorder %v298, 256
      %s301 = scalar_select %p294, 1, 0
      %v302 = vstv %s301
      %vm303 = vcmp.eq.s32.totalorder %v302, 1
      %vm304 = vmand %vm303, %vm299
      %vm305 = vmand %vm303, %vm300
      %v306 = vld [vmem:[%s1] sm:$0xff]
      %v307 = vld [vmem:[%s257] sm:$0xff]
      %v309 = vcombine.high %v307, %v307
      %vm310 = vcmask 31744
      %v312 = vsel %vm310, %v306, 0
      %vm314 = vcmask 1043456
      %v315 = vsel %vm314, %v307, 0
      %v317 = vsel %vm314, %v309, 0
      %319 = vmatprep.subr.mxu0 %v317
      %320 = vmatpush1.msra.mxu0 %v315
      %321 = vmatprep.subr.mxu0 0.0
      %322 = vmatpush1.msra.mxu0 0.0
      %323 = vmatprep.subr.mxu0 0.0
      %324 = vmatpush1.msra.mxu0 0.0
      %325 = vmatprep.subr.mxu0 0.0
      %326 = vmatpush1.msra.mxu0 0.0
      %327 = vmatprep.subr.mxu0 0.0
      %328 = vmatpush1.msra.mxu0 0.0
      %329 = vmatprep.subr.mxu0 0.0
      %330 = vmatpush1.msra.mxu0 0.0
      %331 = vmatprep.subr.mxu0 0.0
      %332 = vmatpush1.msra.mxu0 0.0
      %333 = vmatprep.subr.mxu0 0.0
      %334 = vmatpush1.msra.mxu0 0.0
      %335 = vmatprep.subr.mxu0 0.0
      %336 = vmatpush1.msra.mxu0 0.0
      %337 = vmatprep.subr.mxu0 0.0
      %338 = vmatpush1.msra.mxu0 0.0
      %339 = vmatprep.subr.mxu0 0.0
      %340 = vmatpush1.msra.mxu0 0.0
      %341 = vmatprep.subr.mxu0 0.0
      %342 = vmatpush1.msra.mxu0 0.0
      %343 = vmatprep.subr.mxu0 0.0
      %344 = vmatpush1.msra.mxu0 0.0
      %345 = vmatprep.subr.mxu0 0.0
      %346 = vmatpush1.msra.mxu0 0.0
      %347 = vmatprep.subr.mxu0 0.0
      %348 = vmatpush1.msra.mxu0 0.0
      %349 = vmatprep.subr.mxu0 0.0
      %350 = vmatpush1.msra.mxu0 0.0
      %351 = vmatprep.subr.mxu0 0.0
      %352 = vmatpush1.msra.mxu0 0.0
      %353 = vmatprep.subr.mxu0 0.0
      %354 = vmatpush1.msra.mxu0 0.0
      %355 = vmatprep.subr.mxu0 0.0
      %356 = vmatpush1.msra.mxu0 0.0
      %357 = vmatprep.subr.mxu0 0.0
      %358 = vmatpush1.msra.mxu0 0.0
      %359 = vmatprep.subr.mxu0 0.0
      %360 = vmatpush1.msra.mxu0 0.0
      %361 = vmatprep.subr.mxu0 0.0
      %362 = vmatpush1.msra.mxu0 0.0
      %363 = vmatprep.subr.mxu0 0.0
      %364 = vmatpush1.msra.mxu0 0.0
      %365 = vmatprep.subr.mxu0 0.0
      %366 = vmatpush1.msra.mxu0 0.0
      %367 = vmatprep.subr.mxu0 0.0
      %368 = vmatpush1.msra.mxu0 0.0
      %369 = vmatprep.subr.mxu0 0.0
      %370 = vmatpush1.msra.mxu0 0.0
      %371 = vmatprep.subr.mxu0 0.0
      %372 = vmatpush1.msra.mxu0 0.0
      %373 = vmatprep.subr.mxu0 0.0
      %374 = vmatpush1.msra.mxu0 0.0
      %375 = vmatprep.subr.mxu0 0.0
      %376 = vmatpush1.msra.mxu0 0.0
      %377 = vmatprep.subr.mxu0 0.0
      %378 = vmatpush1.msra.mxu0 0.0
      %379 = vmatprep.subr.mxu0 0.0
      %380 = vmatpush1.msra.mxu0 0.0
      %381 = vmatprep.subr.mxu0 0.0
      %382 = vmatpush1.msra.mxu0 0.0
      %383 = vmatprep.mubr.f32.mxu0 0.0
      %384 = vmatmul.mubr.f32.gmra.mrb[0].mxu0 %v312
      %v385 = vpop.f32.mrb[0].mxu0
      %v386 = vadd.f32 0.0, %v385
      %v387 = vpop.f32.mrb[0].mxu0
      %v388 = vadd.f32 0.0, %v387
      %389 = vdwg.mxu0
      %v390 = vld [vmem:[%s273] sm:$0xff]
      %v391 = vld [vmem:[%s273 + $0x8] sm:$0xff]
      %v392 = vsub.f32 %v386, %v390
      %v393 = vsub.f32 %v388, %v391
      %v394 = vsel %vm304, 1, 0
      %v395 = vsel %vm305, 1, 0
      %vm396 = vcmp.eq.s32.totalorder %v394, 1
      %vm397 = vcmp.eq.s32.totalorder %v395, 1
      %v398 = vsel %vm396, %v392, 0.0
      %v399 = vsel %vm397, %v393, 0.0
      %v400 = vld [vmem:[#allocation2] sm:$0xff]
      %v401 = vld [vmem:[#allocation2 + $0x8] sm:$0xff]
      %v402 = vmul.f32 %v398, %v398
      %v403 = vmul.f32 %v399, %v399
      %v404 = vadd.f32 %v400, %v402
      %v405 = vadd.f32 %v401, %v403
      %406 = vst [vmem:[#allocation2] sm:$0xff] %v404
      %407 = vst [vmem:[#allocation2 + $0x8] sm:$0xff] %v405
      // Predicated region
      $region37: #{fitnet_loss.1} parent=31 // pred_check
        _
      $region38: #{fitnet_loss.1} parent=31 // pred_check_branch
        %409 = sbr.rel (%p284) target = $region40
      $region39: #{fitnet_loss.1} parent=31 // pred_region
        %v410 = vld [vmem:[#allocation2] sm:$0xff]
        %v411 = vld [vmem:[#allocation2 + $0x8] sm:$0xff]
        %v412 = vadd.f32 %v410, %v411
        %413 = vadd.xlane.f32.xlu0 %v412
        %v414 = vpop.xlane.xlu0 %413
        %v415 = vrot.slane %v414, 4
        %v416 = vadd.f32 %v414, %v415
        %v417 = vrot.slane %v416, 2
        %v418 = vadd.f32 %v416, %v417
        %v419 = vrot.slane %v418, 1
        %v420 = vadd.f32 %v418, %v419
        %s421 = vtos %v420
        %v422 = vstv %s421
        %423 = vst [vmem:[%s281] sm:$0xff] %v422
      $region40: #{fitnet_loss.1} parent=31 // pred_fallthru
        _
      %p424 = scmp.lt.s32.totalorder %s19, 1
      %s425 = scalar_select %p424, %s19, 1
      %s426 = smul.addr %s425, 8
      %s427 = scalar_lea.vmem %s3, %s426
      // Predicated region
      $region41: #{fitnet_loss.1} parent=31 // pred_check
        %p428 = pneg %p140
      $region42: #{fitnet_loss.1} parent=31 // pred_check_branch
        %430 = sbr.rel (%p428) target = $region44
      $region43: #{fitnet_loss.1} parent=31 // pred_region
        _
      $region44: #{fitnet_loss.1} parent=31 // pred_fallthru
        _
    $region32: #{fitnet_loss.1} parent=5 // pred_fallthru
      _
    %p431 = scmp.le.s32.totalorder 2, %s9
    // Predicated region
    $region45: #{fitnet_loss.1} parent=5 // pred_check
      %p432 = pneg %p431
    $region46: #{fitnet_loss.1} parent=5 // pred_check_branch
      %434 = sbr.rel (%p432) target = $region48
    $region47: #{fitnet_loss.1} parent=5 // pred_region
      %s435 = ssub.s32 %s9, 2
      // Predicated region
      $region49: #{fitnet_loss.1} parent=47 // pred_check
        %p436 = pneg %p146
      $region50: #{fitnet_loss.1} parent=47 // pred_check_branch
        %438 = sbr.rel (%p436) target = $region52
      $region51: #{fitnet_loss.1} parent=47 // pred_region
        %p439 = scmp.lt.s32.totalorder %s22, 1
        %s440 = scalar_select %p439, %s22, 1
        %s441 = smul.addr %s440, 8
        %s442 = scalar_lea.vmem %s3, %s441
      $region52: #{fitnet_loss.1} parent=47 // pred_fallthru
        _
    $region48: #{fitnet_loss.1} parent=5 // pred_fallthru
      _
  $region6: #{fitnet_loss.1} parent=0 // loop_footer
    %s13 = sadd.s32 1, %s9
  $region7: #{fitnet_loss.1} parent=0 // loop_footer_branch
    %8 = sbr.rel target = $region3
  $region8: #{fitnet_loss.1} parent=0 // loop_exit
    _

</llo_original>
